<compile_context>
chip_gen: v5e
topology: v5e:2x2
jax: 0.10.0
libtpu: 0.0.40
codegen_flags: <defaults>
</compile_context>

<pallas_src>
import functools

import jax
import jax.numpy as jnp
from jax.experimental import pallas as pl
from jax.experimental.pallas import tpu as pltpu

_LANE = 128
_MXU_MIN_C = 128                 # keep MXU dots only when the contraction dim is MXU-sized
_FOLD_BATCH_BYTES = 4 * 2**20    # below this, run the whole batch as a single grid step
_VMEM_BUDGET = 24 * 2**20        # per-step working-set target (fits v7x 32 MiB scoped VMEM)


def _conv1x1_vpu(x, w_ref):
    """1x1 conv as an unrolled VPU broadcast-FMA chain (small C).

    x: (NB, C_in, TM); w_ref: (C_in, C_out, 1) VMEM ref with w[c, o, 0] = W_torch[o, c].
    Returns f32 (NB, C_out, TM).  Pure VPU: no tiny MXU matmuls, no MRF serialization.
    """
    c_in = w_ref.shape[0]
    xf = x.astype(jnp.float32)
    acc = None
    for c in range(c_in):
        wc = w_ref[c][None, :, :].astype(jnp.float32)   # (1, C_out, 1): varies on sublanes
        xc = xf[:, c:c + 1, :]                          # (NB, 1, TM): varies on lanes
        t = wc * xc                                     # -> (NB, C_out, TM)
        acc = t if acc is None else acc + t
    return acc


def _conv1x1_mxu(x, w_ref):
    """1x1 conv on the MXU (large C): native-dtype operands, f32 accumulation.

    x: (NB, C_in, TM); w_ref: (C_out, C_in) VMEM ref.  Returns f32 (NB, C_out, TM).
    """
    w = w_ref[...]
    outs = [jnp.dot(w, x[n], preferred_element_type=jnp.float32)
            for n in range(x.shape[0])]
    return outs[0][None] if len(outs) == 1 else jnp.stack(outs, axis=0)


def _attention_net_kernel(enc_ref, dec_ref,
                          we_ref, wd_ref, w2_ref, w3_ref, w4_ref,
                          bed_ref, b2_ref, b3_ref, b4_ref,
                          out_ref, *, conv):
    # enc/dec/out blocks: (NB, C, TM) with TM on the 128-lane axis.
    def bias(b_ref):
        return b_ref[...][None, :, :].astype(jnp.float32)   # (C, 1) -> (1, C, 1)

    # x = relu(conv_enc(encoded) + conv_dec(decoded))   (enc+dec biases pre-combined)
    x = conv(enc_ref[...], we_ref) + conv(dec_ref[...], wd_ref) + bias(bed_ref)
    x = jnp.maximum(x, 0.0)
    # x = sigmoid(conv2(x))
    x = jax.nn.sigmoid(conv(x, w2_ref) + bias(b2_ref))
    # x = conv3(x) * encoded      (re-read encoded from VMEM here; don't keep a copy alive)
    x = (conv(x, w3_ref) + bias(b3_ref)) * enc_ref[...].astype(jnp.float32)
    # x = relu(conv4(x))
    x = jnp.maximum(conv(x, w4_ref) + bias(b4_ref), 0.0)
    out_ref[...] = x.astype(out_ref.dtype)


def attention_net_forward(encoded, decoded,
                          w_enc, b_enc, w_dec, b_dec,
                          w2, b2, w3, b3, w4, b4):
    """encoded/decoded: NCHW; w*: (C, C, 1, 1) PyTorch 1x1-conv weights; b*: (C,)."""
    N, C, H, W = encoded.shape
    M = H * W
    itemsize = jnp.dtype(encoded.dtype).itemsize

    # ---- lane-dense spatial axis: NCHW -> (N, C, H*W), padded to a multiple of 128 ----
    m_pad = max(_LANE, ((M + _LANE - 1) // _LANE) * _LANE)
    enc = encoded.reshape(N, C, M)
    dec = decoded.reshape(N, C, M)
    if m_pad != M:
        pad = ((0, 0), (0, 0), (0, m_pad - M))
        enc = jnp.pad(enc, pad)
        dec = jnp.pad(dec, pad)

    # ---- tiling: one batch-wide step when tiny, else spatial tiles sized for VMEM ----
    def step_bytes(nb, tm):
        io = 3 * 2 * nb * C * tm * itemsize    # enc/dec/out blocks, double-buffered
        live = 4 * nb * C * tm * 4             # ~4 live f32 intermediates
        return io + live

    if step_bytes(N, m_pad) <= _FOLD_BATCH_BYTES:
        nb, tm = N, m_pad                      # single grid step: no per-step overhead
    else:
        nb = 1
        tm = (_VMEM_BUDGET // (C * (6 * itemsize + 16))) // _LANE * _LANE
        tm = int(max(_LANE, min(tm, m_pad, 8192)))
    grid = (pl.cdiv(N, nb), pl.cdiv(m_pad, tm))

    # ---- weights: VPU layout (C_in, C_out, 1) for small C, (C_out, C_in) for MXU ----
    use_mxu = C >= _MXU_MIN_C
    if use_mxu:
        prep_w = lambda w: w[:, :, 0, 0]                        # (C_out, C_in)
        w_spec = pl.BlockSpec((C, C), lambda b, m: (0, 0))
        conv = _conv1x1_mxu
    else:
        prep_w = lambda w: w[:, :, 0, 0].T.reshape(C, C, 1)     # (C_in, C_out, 1)
        w_spec = pl.BlockSpec((C, C, 1), lambda b, m: (0, 0, 0))
        conv = _conv1x1_vpu

    we, wd = prep_w(w_enc), prep_w(w_dec)
    w2m, w3m, w4m = prep_w(w2), prep_w(w3), prep_w(w4)
    b_ed = (b_enc + b_dec).reshape(C, 1)       # conv_enc/conv_dec biases add before the ReLU
    b2c, b3c, b4c = b2.reshape(C, 1), b3.reshape(C, 1), b4.reshape(C, 1)

    data_spec = pl.BlockSpec((nb, C, tm), lambda b, m: (b, 0, m))
    b_spec = pl.BlockSpec((C, 1), lambda b, m: (0, 0))

    vmem_limit = int(min(64 * 2**20, max(32 * 2**20, 2 * step_bytes(nb, tm))))

    out = pl.pallas_call(
        functools.partial(_attention_net_kernel, conv=conv),
        out_shape=jax.ShapeDtypeStruct((N, C, m_pad), encoded.dtype),
        grid=grid,
        in_specs=[data_spec, data_spec] + [w_spec] * 5 + [b_spec] * 4,
        out_specs=data_spec,
        compiler_params=pltpu.CompilerParams(
            dimension_semantics=("parallel", "parallel"),
            vmem_limit_bytes=vmem_limit),
    )(enc, dec, we, wd, w2m, w3m, w4m, b_ed, b2c, b3c, b4c)

    if m_pad != M:
        out = out[:, :, :M]
    return out.reshape(N, C, H, W)


if __name__ == "__main__":
    N, C, H, W = 2, 4, 16, 16

    key = jax.random.PRNGKey(0)
    ks = jax.random.split(key, 12)
    encoded = jax.random.normal(ks[0], (N, C, H, W), jnp.float32)
    decoded = jax.random.normal(ks[1], (N, C, H, W), jnp.float32)

    def mk_conv(kw, kb):
        w = 0.2 * jax.random.normal(kw, (C, C, 1, 1), jnp.float32)
        b = 0.1 * jax.random.normal(kb, (C,), jnp.float32)
        return w, b

    w_enc, b_enc = mk_conv(ks[2], ks[3])
    w_dec, b_dec = mk_conv(ks[4], ks[5])
    w2, b2 = mk_conv(ks[6], ks[7])
    w3, b3 = mk_conv(ks[8], ks[9])
    w4, b4 = mk_conv(ks[10], ks[11])

    out = jax.jit(attention_net_forward)(encoded, decoded,
                                         w_enc, b_enc, w_dec, b_dec,
                                         w2, b2, w3, b3, w4, b4)
    out = jax.block_until_ready(out)

    # Pure-JAX reference matching the PyTorch forward.
    def conv1x1(x, w, b):
        return jnp.einsum('oc,nchw->nohw', w[:, :, 0, 0], x) + b[None, :, None, None]

    x = jnp.maximum(conv1x1(encoded, w_enc, b_enc) + conv1x1(decoded, w_dec, b_dec), 0.0)
    x = jax.nn.sigmoid(conv1x1(x, w2, b2))
    x = conv1x1(x, w3, b3) * encoded
    ref = jnp.maximum(conv1x1(x, w4, b4), 0.0)

    assert out.shape == (N, C, H, W)
    assert jnp.allclose(out, ref, rtol=1e-4, atol=1e-5), "mismatch vs reference"
    print("KERNEL_OK")
</pallas_src>

<mosaic_0001>
module attributes {stable_mosaic.version = 11 : i64} {
  func.func @_attention_net_kernel(%arg0: i32, %arg1: i32, %arg2: memref<2x4x256xf32, #tpu.memory_space<vmem>>, %arg3: memref<2x4x256xf32, #tpu.memory_space<vmem>>, %arg4: memref<4x4x1xf32, #tpu.memory_space<vmem>>, %arg5: memref<4x4x1xf32, #tpu.memory_space<vmem>>, %arg6: memref<4x4x1xf32, #tpu.memory_space<vmem>>, %arg7: memref<4x4x1xf32, #tpu.memory_space<vmem>>, %arg8: memref<4x4x1xf32, #tpu.memory_space<vmem>>, %arg9: memref<4x1xf32, #tpu.memory_space<vmem>>, %arg10: memref<4x1xf32, #tpu.memory_space<vmem>>, %arg11: memref<4x1xf32, #tpu.memory_space<vmem>>, %arg12: memref<4x1xf32, #tpu.memory_space<vmem>>, %arg13: memref<2x4x256xf32, #tpu.memory_space<vmem>>) attributes {dimension_semantics = [#tpu.dimension_semantics<parallel>, #tpu.dimension_semantics<parallel>], iteration_bounds = array<i64: 1, 1>, scalar_prefetch = 0 : i64, scratch_operands = 0 : i64, tpu.core_type = #tpu.core_type<tc>, window_params = [{transform_indices = @transform_0, window_bounds = array<i64: 2, 4, 256>}, {transform_indices = @transform_1, window_bounds = array<i64: 2, 4, 256>}, {pipeline_mode = #tpu.pipeline_mode<synchronous>, transform_indices = @transform_2, window_bounds = array<i64: 4, 4, 1>}, {pipeline_mode = #tpu.pipeline_mode<synchronous>, transform_indices = @transform_3, window_bounds = array<i64: 4, 4, 1>}, {pipeline_mode = #tpu.pipeline_mode<synchronous>, transform_indices = @transform_4, window_bounds = array<i64: 4, 4, 1>}, {pipeline_mode = #tpu.pipeline_mode<synchronous>, transform_indices = @transform_5, window_bounds = array<i64: 4, 4, 1>}, {pipeline_mode = #tpu.pipeline_mode<synchronous>, transform_indices = @transform_6, window_bounds = array<i64: 4, 4, 1>}, {pipeline_mode = #tpu.pipeline_mode<synchronous>, transform_indices = @transform_7, window_bounds = array<i64: 4, 1>}, {pipeline_mode = #tpu.pipeline_mode<synchronous>, transform_indices = @transform_8, window_bounds = array<i64: 4, 1>}, {pipeline_mode = #tpu.pipeline_mode<synchronous>, transform_indices = @transform_9, window_bounds = array<i64: 4, 1>}, {pipeline_mode = #tpu.pipeline_mode<synchronous>, transform_indices = @transform_10, window_bounds = array<i64: 4, 1>}, {transform_indices = @transform_11, window_bounds = array<i64: 2, 4, 256>}]} {
    %c0 = arith.constant 0 : index
    %c0_0 = arith.constant 0 : index
    %c0_1 = arith.constant 0 : index
    %0 = vector.load %arg2[%c0, %c0_0, %c0_1] : memref<2x4x256xf32, #tpu.memory_space<vmem>>, vector<2x4x256xf32>
    %c0_2 = arith.constant 0 : index
    %c0_3 = arith.constant 0 : index
    %c0_4 = arith.constant 0 : index
    %1 = vector.load %arg4[%c0_2, %c0_3, %c0_4] : memref<4x4x1xf32, #tpu.memory_space<vmem>>, vector<1x4x1xf32>
    %2 = vector.shape_cast %1 : vector<1x4x1xf32> to vector<4x1xf32>
    %3 = vector.shape_cast %2 : vector<4x1xf32> to vector<1x4x1xf32>
    %4 = vector.extract_strided_slice %0 {offsets = [0, 0, 0], sizes = [2, 1, 256], strides = [1, 1, 1]} : vector<2x4x256xf32> to vector<2x1x256xf32>
    %5 = vector.broadcast %3 : vector<1x4x1xf32> to vector<2x4x256xf32>
    %6 = vector.broadcast %4 : vector<2x1x256xf32> to vector<2x4x256xf32>
    %7 = arith.mulf %5, %6 : vector<2x4x256xf32>
    %c1 = arith.constant 1 : index
    %c0_5 = arith.constant 0 : index
    %c0_6 = arith.constant 0 : index
    %8 = vector.load %arg4[%c1, %c0_5, %c0_6] : memref<4x4x1xf32, #tpu.memory_space<vmem>>, vector<1x4x1xf32>
    %9 = vector.shape_cast %8 : vector<1x4x1xf32> to vector<4x1xf32>
    %10 = vector.shape_cast %9 : vector<4x1xf32> to vector<1x4x1xf32>
    %11 = vector.extract_strided_slice %0 {offsets = [0, 1, 0], sizes = [2, 1, 256], strides = [1, 1, 1]} : vector<2x4x256xf32> to vector<2x1x256xf32>
    %12 = vector.broadcast %10 : vector<1x4x1xf32> to vector<2x4x256xf32>
    %13 = vector.broadcast %11 : vector<2x1x256xf32> to vector<2x4x256xf32>
    %14 = arith.mulf %12, %13 : vector<2x4x256xf32>
    %15 = arith.addf %7, %14 : vector<2x4x256xf32>
    %c2 = arith.constant 2 : index
    %c0_7 = arith.constant 0 : index
    %c0_8 = arith.constant 0 : index
    %16 = vector.load %arg4[%c2, %c0_7, %c0_8] : memref<4x4x1xf32, #tpu.memory_space<vmem>>, vector<1x4x1xf32>
    %17 = vector.shape_cast %16 : vector<1x4x1xf32> to vector<4x1xf32>
    %18 = vector.shape_cast %17 : vector<4x1xf32> to vector<1x4x1xf32>
    %19 = vector.extract_strided_slice %0 {offsets = [0, 2, 0], sizes = [2, 1, 256], strides = [1, 1, 1]} : vector<2x4x256xf32> to vector<2x1x256xf32>
    %20 = vector.broadcast %18 : vector<1x4x1xf32> to vector<2x4x256xf32>
    %21 = vector.broadcast %19 : vector<2x1x256xf32> to vector<2x4x256xf32>
    %22 = arith.mulf %20, %21 : vector<2x4x256xf32>
    %23 = arith.addf %15, %22 : vector<2x4x256xf32>
    %c3 = arith.constant 3 : index
    %c0_9 = arith.constant 0 : index
    %c0_10 = arith.constant 0 : index
    %24 = vector.load %arg4[%c3, %c0_9, %c0_10] : memref<4x4x1xf32, #tpu.memory_space<vmem>>, vector<1x4x1xf32>
    %25 = vector.shape_cast %24 : vector<1x4x1xf32> to vector<4x1xf32>
    %26 = vector.shape_cast %25 : vector<4x1xf32> to vector<1x4x1xf32>
    %27 = vector.extract_strided_slice %0 {offsets = [0, 3, 0], sizes = [2, 1, 256], strides = [1, 1, 1]} : vector<2x4x256xf32> to vector<2x1x256xf32>
    %28 = vector.broadcast %26 : vector<1x4x1xf32> to vector<2x4x256xf32>
    %29 = vector.broadcast %27 : vector<2x1x256xf32> to vector<2x4x256xf32>
    %30 = arith.mulf %28, %29 : vector<2x4x256xf32>
    %31 = arith.addf %23, %30 : vector<2x4x256xf32>
    %c0_11 = arith.constant 0 : index
    %c0_12 = arith.constant 0 : index
    %c0_13 = arith.constant 0 : index
    %32 = vector.load %arg3[%c0_11, %c0_12, %c0_13] : memref<2x4x256xf32, #tpu.memory_space<vmem>>, vector<2x4x256xf32>
    %c0_14 = arith.constant 0 : index
    %c0_15 = arith.constant 0 : index
    %c0_16 = arith.constant 0 : index
    %33 = vector.load %arg5[%c0_14, %c0_15, %c0_16] : memref<4x4x1xf32, #tpu.memory_space<vmem>>, vector<1x4x1xf32>
    %34 = vector.shape_cast %33 : vector<1x4x1xf32> to vector<4x1xf32>
    %35 = vector.shape_cast %34 : vector<4x1xf32> to vector<1x4x1xf32>
    %36 = vector.extract_strided_slice %32 {offsets = [0, 0, 0], sizes = [2, 1, 256], strides = [1, 1, 1]} : vector<2x4x256xf32> to vector<2x1x256xf32>
    %37 = vector.broadcast %35 : vector<1x4x1xf32> to vector<2x4x256xf32>
    %38 = vector.broadcast %36 : vector<2x1x256xf32> to vector<2x4x256xf32>
    %39 = arith.mulf %37, %38 : vector<2x4x256xf32>
    %c1_17 = arith.constant 1 : index
    %c0_18 = arith.constant 0 : index
    %c0_19 = arith.constant 0 : index
    %40 = vector.load %arg5[%c1_17, %c0_18, %c0_19] : memref<4x4x1xf32, #tpu.memory_space<vmem>>, vector<1x4x1xf32>
    %41 = vector.shape_cast %40 : vector<1x4x1xf32> to vector<4x1xf32>
    %42 = vector.shape_cast %41 : vector<4x1xf32> to vector<1x4x1xf32>
    %43 = vector.extract_strided_slice %32 {offsets = [0, 1, 0], sizes = [2, 1, 256], strides = [1, 1, 1]} : vector<2x4x256xf32> to vector<2x1x256xf32>
    %44 = vector.broadcast %42 : vector<1x4x1xf32> to vector<2x4x256xf32>
    %45 = vector.broadcast %43 : vector<2x1x256xf32> to vector<2x4x256xf32>
    %46 = arith.mulf %44, %45 : vector<2x4x256xf32>
    %47 = arith.addf %39, %46 : vector<2x4x256xf32>
    %c2_20 = arith.constant 2 : index
    %c0_21 = arith.constant 0 : index
    %c0_22 = arith.constant 0 : index
    %48 = vector.load %arg5[%c2_20, %c0_21, %c0_22] : memref<4x4x1xf32, #tpu.memory_space<vmem>>, vector<1x4x1xf32>
    %49 = vector.shape_cast %48 : vector<1x4x1xf32> to vector<4x1xf32>
    %50 = vector.shape_cast %49 : vector<4x1xf32> to vector<1x4x1xf32>
    %51 = vector.extract_strided_slice %32 {offsets = [0, 2, 0], sizes = [2, 1, 256], strides = [1, 1, 1]} : vector<2x4x256xf32> to vector<2x1x256xf32>
    %52 = vector.broadcast %50 : vector<1x4x1xf32> to vector<2x4x256xf32>
    %53 = vector.broadcast %51 : vector<2x1x256xf32> to vector<2x4x256xf32>
    %54 = arith.mulf %52, %53 : vector<2x4x256xf32>
    %55 = arith.addf %47, %54 : vector<2x4x256xf32>
    %c3_23 = arith.constant 3 : index
    %c0_24 = arith.constant 0 : index
    %c0_25 = arith.constant 0 : index
    %56 = vector.load %arg5[%c3_23, %c0_24, %c0_25] : memref<4x4x1xf32, #tpu.memory_space<vmem>>, vector<1x4x1xf32>
    %57 = vector.shape_cast %56 : vector<1x4x1xf32> to vector<4x1xf32>
    %58 = vector.shape_cast %57 : vector<4x1xf32> to vector<1x4x1xf32>
    %59 = vector.extract_strided_slice %32 {offsets = [0, 3, 0], sizes = [2, 1, 256], strides = [1, 1, 1]} : vector<2x4x256xf32> to vector<2x1x256xf32>
    %60 = vector.broadcast %58 : vector<1x4x1xf32> to vector<2x4x256xf32>
    %61 = vector.broadcast %59 : vector<2x1x256xf32> to vector<2x4x256xf32>
    %62 = arith.mulf %60, %61 : vector<2x4x256xf32>
    %63 = arith.addf %55, %62 : vector<2x4x256xf32>
    %64 = arith.addf %31, %63 : vector<2x4x256xf32>
    %c0_26 = arith.constant 0 : index
    %c0_27 = arith.constant 0 : index
    %65 = vector.load %arg9[%c0_26, %c0_27] : memref<4x1xf32, #tpu.memory_space<vmem>>, vector<4x1xf32>
    %66 = vector.shape_cast %65 : vector<4x1xf32> to vector<1x4x1xf32>
    %67 = vector.broadcast %66 : vector<1x4x1xf32> to vector<2x4x256xf32>
    %68 = arith.addf %64, %67 : vector<2x4x256xf32>
    %cst = arith.constant 0.000000e+00 : f32
    %69 = vector.broadcast %cst : f32 to vector<2x4x256xf32>
    %70 = arith.maximumf %68, %69 : vector<2x4x256xf32>
    %c0_28 = arith.constant 0 : index
    %c0_29 = arith.constant 0 : index
    %c0_30 = arith.constant 0 : index
    %71 = vector.load %arg6[%c0_28, %c0_29, %c0_30] : memref<4x4x1xf32, #tpu.memory_space<vmem>>, vector<1x4x1xf32>
    %72 = vector.shape_cast %71 : vector<1x4x1xf32> to vector<4x1xf32>
    %73 = vector.shape_cast %72 : vector<4x1xf32> to vector<1x4x1xf32>
    %74 = vector.extract_strided_slice %70 {offsets = [0, 0, 0], sizes = [2, 1, 256], strides = [1, 1, 1]} : vector<2x4x256xf32> to vector<2x1x256xf32>
    %75 = vector.broadcast %73 : vector<1x4x1xf32> to vector<2x4x256xf32>
    %76 = vector.broadcast %74 : vector<2x1x256xf32> to vector<2x4x256xf32>
    %77 = arith.mulf %75, %76 : vector<2x4x256xf32>
    %c1_31 = arith.constant 1 : index
    %c0_32 = arith.constant 0 : index
    %c0_33 = arith.constant 0 : index
    %78 = vector.load %arg6[%c1_31, %c0_32, %c0_33] : memref<4x4x1xf32, #tpu.memory_space<vmem>>, vector<1x4x1xf32>
    %79 = vector.shape_cast %78 : vector<1x4x1xf32> to vector<4x1xf32>
    %80 = vector.shape_cast %79 : vector<4x1xf32> to vector<1x4x1xf32>
    %81 = vector.extract_strided_slice %70 {offsets = [0, 1, 0], sizes = [2, 1, 256], strides = [1, 1, 1]} : vector<2x4x256xf32> to vector<2x1x256xf32>
    %82 = vector.broadcast %80 : vector<1x4x1xf32> to vector<2x4x256xf32>
    %83 = vector.broadcast %81 : vector<2x1x256xf32> to vector<2x4x256xf32>
    %84 = arith.mulf %82, %83 : vector<2x4x256xf32>
    %85 = arith.addf %77, %84 : vector<2x4x256xf32>
    %c2_34 = arith.constant 2 : index
    %c0_35 = arith.constant 0 : index
    %c0_36 = arith.constant 0 : index
    %86 = vector.load %arg6[%c2_34, %c0_35, %c0_36] : memref<4x4x1xf32, #tpu.memory_space<vmem>>, vector<1x4x1xf32>
    %87 = vector.shape_cast %86 : vector<1x4x1xf32> to vector<4x1xf32>
    %88 = vector.shape_cast %87 : vector<4x1xf32> to vector<1x4x1xf32>
    %89 = vector.extract_strided_slice %70 {offsets = [0, 2, 0], sizes = [2, 1, 256], strides = [1, 1, 1]} : vector<2x4x256xf32> to vector<2x1x256xf32>
    %90 = vector.broadcast %88 : vector<1x4x1xf32> to vector<2x4x256xf32>
    %91 = vector.broadcast %89 : vector<2x1x256xf32> to vector<2x4x256xf32>
    %92 = arith.mulf %90, %91 : vector<2x4x256xf32>
    %93 = arith.addf %85, %92 : vector<2x4x256xf32>
    %c3_37 = arith.constant 3 : index
    %c0_38 = arith.constant 0 : index
    %c0_39 = arith.constant 0 : index
    %94 = vector.load %arg6[%c3_37, %c0_38, %c0_39] : memref<4x4x1xf32, #tpu.memory_space<vmem>>, vector<1x4x1xf32>
    %95 = vector.shape_cast %94 : vector<1x4x1xf32> to vector<4x1xf32>
    %96 = vector.shape_cast %95 : vector<4x1xf32> to vector<1x4x1xf32>
    %97 = vector.extract_strided_slice %70 {offsets = [0, 3, 0], sizes = [2, 1, 256], strides = [1, 1, 1]} : vector<2x4x256xf32> to vector<2x1x256xf32>
    %98 = vector.broadcast %96 : vector<1x4x1xf32> to vector<2x4x256xf32>
    %99 = vector.broadcast %97 : vector<2x1x256xf32> to vector<2x4x256xf32>
    %100 = arith.mulf %98, %99 : vector<2x4x256xf32>
    %101 = arith.addf %93, %100 : vector<2x4x256xf32>
    %c0_40 = arith.constant 0 : index
    %c0_41 = arith.constant 0 : index
    %102 = vector.load %arg10[%c0_40, %c0_41] : memref<4x1xf32, #tpu.memory_space<vmem>>, vector<4x1xf32>
    %103 = vector.shape_cast %102 : vector<4x1xf32> to vector<1x4x1xf32>
    %104 = vector.broadcast %103 : vector<1x4x1xf32> to vector<2x4x256xf32>
    %105 = arith.addf %101, %104 : vector<2x4x256xf32>
    %106 = arith.negf %105 : vector<2x4x256xf32>
    %107 = math.exp %106 : vector<2x4x256xf32>
    %cst_42 = arith.constant 1.000000e+00 : f32
    %108 = vector.broadcast %cst_42 : f32 to vector<2x4x256xf32>
    %109 = arith.addf %108, %107 : vector<2x4x256xf32>
    %110 = arith.divf %108, %109 : vector<2x4x256xf32>
    %c0_43 = arith.constant 0 : index
    %c0_44 = arith.constant 0 : index
    %c0_45 = arith.constant 0 : index
    %111 = vector.load %arg7[%c0_43, %c0_44, %c0_45] : memref<4x4x1xf32, #tpu.memory_space<vmem>>, vector<1x4x1xf32>
    %112 = vector.shape_cast %111 : vector<1x4x1xf32> to vector<4x1xf32>
    %113 = vector.shape_cast %112 : vector<4x1xf32> to vector<1x4x1xf32>
    %114 = vector.extract_strided_slice %110 {offsets = [0, 0, 0], sizes = [2, 1, 256], strides = [1, 1, 1]} : vector<2x4x256xf32> to vector<2x1x256xf32>
    %115 = vector.broadcast %113 : vector<1x4x1xf32> to vector<2x4x256xf32>
    %116 = vector.broadcast %114 : vector<2x1x256xf32> to vector<2x4x256xf32>
    %117 = arith.mulf %115, %116 : vector<2x4x256xf32>
    %c1_46 = arith.constant 1 : index
    %c0_47 = arith.constant 0 : index
    %c0_48 = arith.constant 0 : index
    %118 = vector.load %arg7[%c1_46, %c0_47, %c0_48] : memref<4x4x1xf32, #tpu.memory_space<vmem>>, vector<1x4x1xf32>
    %119 = vector.shape_cast %118 : vector<1x4x1xf32> to vector<4x1xf32>
    %120 = vector.shape_cast %119 : vector<4x1xf32> to vector<1x4x1xf32>
    %121 = vector.extract_strided_slice %110 {offsets = [0, 1, 0], sizes = [2, 1, 256], strides = [1, 1, 1]} : vector<2x4x256xf32> to vector<2x1x256xf32>
    %122 = vector.broadcast %120 : vector<1x4x1xf32> to vector<2x4x256xf32>
    %123 = vector.broadcast %121 : vector<2x1x256xf32> to vector<2x4x256xf32>
    %124 = arith.mulf %122, %123 : vector<2x4x256xf32>
    %125 = arith.addf %117, %124 : vector<2x4x256xf32>
    %c2_49 = arith.constant 2 : index
    %c0_50 = arith.constant 0 : index
    %c0_51 = arith.constant 0 : index
    %126 = vector.load %arg7[%c2_49, %c0_50, %c0_51] : memref<4x4x1xf32, #tpu.memory_space<vmem>>, vector<1x4x1xf32>
    %127 = vector.shape_cast %126 : vector<1x4x1xf32> to vector<4x1xf32>
    %128 = vector.shape_cast %127 : vector<4x1xf32> to vector<1x4x1xf32>
    %129 = vector.extract_strided_slice %110 {offsets = [0, 2, 0], sizes = [2, 1, 256], strides = [1, 1, 1]} : vector<2x4x256xf32> to vector<2x1x256xf32>
    %130 = vector.broadcast %128 : vector<1x4x1xf32> to vector<2x4x256xf32>
    %131 = vector.broadcast %129 : vector<2x1x256xf32> to vector<2x4x256xf32>
    %132 = arith.mulf %130, %131 : vector<2x4x256xf32>
    %133 = arith.addf %125, %132 : vector<2x4x256xf32>
    %c3_52 = arith.constant 3 : index
    %c0_53 = arith.constant 0 : index
    %c0_54 = arith.constant 0 : index
    %134 = vector.load %arg7[%c3_52, %c0_53, %c0_54] : memref<4x4x1xf32, #tpu.memory_space<vmem>>, vector<1x4x1xf32>
    %135 = vector.shape_cast %134 : vector<1x4x1xf32> to vector<4x1xf32>
    %136 = vector.shape_cast %135 : vector<4x1xf32> to vector<1x4x1xf32>
    %137 = vector.extract_strided_slice %110 {offsets = [0, 3, 0], sizes = [2, 1, 256], strides = [1, 1, 1]} : vector<2x4x256xf32> to vector<2x1x256xf32>
    %138 = vector.broadcast %136 : vector<1x4x1xf32> to vector<2x4x256xf32>
    %139 = vector.broadcast %137 : vector<2x1x256xf32> to vector<2x4x256xf32>
    %140 = arith.mulf %138, %139 : vector<2x4x256xf32>
    %141 = arith.addf %133, %140 : vector<2x4x256xf32>
    %c0_55 = arith.constant 0 : index
    %c0_56 = arith.constant 0 : index
    %142 = vector.load %arg11[%c0_55, %c0_56] : memref<4x1xf32, #tpu.memory_space<vmem>>, vector<4x1xf32>
    %143 = vector.shape_cast %142 : vector<4x1xf32> to vector<1x4x1xf32>
    %144 = vector.broadcast %143 : vector<1x4x1xf32> to vector<2x4x256xf32>
    %145 = arith.addf %141, %144 : vector<2x4x256xf32>
    %c0_57 = arith.constant 0 : index
    %c0_58 = arith.constant 0 : index
    %c0_59 = arith.constant 0 : index
    %146 = vector.load %arg2[%c0_57, %c0_58, %c0_59] : memref<2x4x256xf32, #tpu.memory_space<vmem>>, vector<2x4x256xf32>
    %147 = arith.mulf %145, %146 : vector<2x4x256xf32>
    %c0_60 = arith.constant 0 : index
    %c0_61 = arith.constant 0 : index
    %c0_62 = arith.constant 0 : index
    %148 = vector.load %arg8[%c0_60, %c0_61, %c0_62] : memref<4x4x1xf32, #tpu.memory_space<vmem>>, vector<1x4x1xf32>
    %149 = vector.shape_cast %148 : vector<1x4x1xf32> to vector<4x1xf32>
    %150 = vector.shape_cast %149 : vector<4x1xf32> to vector<1x4x1xf32>
    %151 = vector.extract_strided_slice %147 {offsets = [0, 0, 0], sizes = [2, 1, 256], strides = [1, 1, 1]} : vector<2x4x256xf32> to vector<2x1x256xf32>
    %152 = vector.broadcast %150 : vector<1x4x1xf32> to vector<2x4x256xf32>
    %153 = vector.broadcast %151 : vector<2x1x256xf32> to vector<2x4x256xf32>
    %154 = arith.mulf %152, %153 : vector<2x4x256xf32>
    %c1_63 = arith.constant 1 : index
    %c0_64 = arith.constant 0 : index
    %c0_65 = arith.constant 0 : index
    %155 = vector.load %arg8[%c1_63, %c0_64, %c0_65] : memref<4x4x1xf32, #tpu.memory_space<vmem>>, vector<1x4x1xf32>
    %156 = vector.shape_cast %155 : vector<1x4x1xf32> to vector<4x1xf32>
    %157 = vector.shape_cast %156 : vector<4x1xf32> to vector<1x4x1xf32>
    %158 = vector.extract_strided_slice %147 {offsets = [0, 1, 0], sizes = [2, 1, 256], strides = [1, 1, 1]} : vector<2x4x256xf32> to vector<2x1x256xf32>
    %159 = vector.broadcast %157 : vector<1x4x1xf32> to vector<2x4x256xf32>
    %160 = vector.broadcast %158 : vector<2x1x256xf32> to vector<2x4x256xf32>
    %161 = arith.mulf %159, %160 : vector<2x4x256xf32>
    %162 = arith.addf %154, %161 : vector<2x4x256xf32>
    %c2_66 = arith.constant 2 : index
    %c0_67 = arith.constant 0 : index
    %c0_68 = arith.constant 0 : index
    %163 = vector.load %arg8[%c2_66, %c0_67, %c0_68] : memref<4x4x1xf32, #tpu.memory_space<vmem>>, vector<1x4x1xf32>
    %164 = vector.shape_cast %163 : vector<1x4x1xf32> to vector<4x1xf32>
    %165 = vector.shape_cast %164 : vector<4x1xf32> to vector<1x4x1xf32>
    %166 = vector.extract_strided_slice %147 {offsets = [0, 2, 0], sizes = [2, 1, 256], strides = [1, 1, 1]} : vector<2x4x256xf32> to vector<2x1x256xf32>
    %167 = vector.broadcast %165 : vector<1x4x1xf32> to vector<2x4x256xf32>
    %168 = vector.broadcast %166 : vector<2x1x256xf32> to vector<2x4x256xf32>
    %169 = arith.mulf %167, %168 : vector<2x4x256xf32>
    %170 = arith.addf %162, %169 : vector<2x4x256xf32>
    %c3_69 = arith.constant 3 : index
    %c0_70 = arith.constant 0 : index
    %c0_71 = arith.constant 0 : index
    %171 = vector.load %arg8[%c3_69, %c0_70, %c0_71] : memref<4x4x1xf32, #tpu.memory_space<vmem>>, vector<1x4x1xf32>
    %172 = vector.shape_cast %171 : vector<1x4x1xf32> to vector<4x1xf32>
    %173 = vector.shape_cast %172 : vector<4x1xf32> to vector<1x4x1xf32>
    %174 = vector.extract_strided_slice %147 {offsets = [0, 3, 0], sizes = [2, 1, 256], strides = [1, 1, 1]} : vector<2x4x256xf32> to vector<2x1x256xf32>
    %175 = vector.broadcast %173 : vector<1x4x1xf32> to vector<2x4x256xf32>
    %176 = vector.broadcast %174 : vector<2x1x256xf32> to vector<2x4x256xf32>
    %177 = arith.mulf %175, %176 : vector<2x4x256xf32>
    %178 = arith.addf %170, %177 : vector<2x4x256xf32>
    %c0_72 = arith.constant 0 : index
    %c0_73 = arith.constant 0 : index
    %179 = vector.load %arg12[%c0_72, %c0_73] : memref<4x1xf32, #tpu.memory_space<vmem>>, vector<4x1xf32>
    %180 = vector.shape_cast %179 : vector<4x1xf32> to vector<1x4x1xf32>
    %181 = vector.broadcast %180 : vector<1x4x1xf32> to vector<2x4x256xf32>
    %182 = arith.addf %178, %181 : vector<2x4x256xf32>
    %cst_74 = arith.constant 0.000000e+00 : f32
    %183 = vector.broadcast %cst_74 : f32 to vector<2x4x256xf32>
    %184 = arith.maximumf %182, %183 : vector<2x4x256xf32>
    %c0_75 = arith.constant 0 : index
    %c0_76 = arith.constant 0 : index
    %c0_77 = arith.constant 0 : index
    %185 = vector.load %arg13[%c0_75, %c0_76, %c0_77] : memref<2x4x256xf32, #tpu.memory_space<vmem>>, vector<2x4x256xf32>
    tpu.vector_store %arg13[%c0_75, %c0_76, %c0_77], %184 {strides = array<i32>} : memref<2x4x256xf32, #tpu.memory_space<vmem>>, vector<2x4x256xf32>,
    return
  }
  func.func @transform_0(%arg0: i32, %arg1: i32) -> (i32, i32, i32) {
    %c0_i32 = arith.constant 0 : i32
    %c0_i32_0 = arith.constant 0 : i32
    return %arg0, %c0_i32, %arg1 : i32, i32, i32
  }
  func.func @transform_1(%arg0: i32, %arg1: i32) -> (i32, i32, i32) {
    %c0_i32 = arith.constant 0 : i32
    %c0_i32_0 = arith.constant 0 : i32
    return %arg0, %c0_i32, %arg1 : i32, i32, i32
  }
  func.func @transform_2(%arg0: i32, %arg1: i32) -> (i32, i32, i32) {
    %c0_i32 = arith.constant 0 : i32
    %c0_i32_0 = arith.constant 0 : i32
    %c0_i32_1 = arith.constant 0 : i32
    %c0_i32_2 = arith.constant 0 : i32
    return %c0_i32, %c0_i32_0, %c0_i32_1 : i32, i32, i32
  }
  func.func @transform_3(%arg0: i32, %arg1: i32) -> (i32, i32, i32) {
    %c0_i32 = arith.constant 0 : i32
    %c0_i32_0 = arith.constant 0 : i32
    %c0_i32_1 = arith.constant 0 : i32
    %c0_i32_2 = arith.constant 0 : i32
    return %c0_i32, %c0_i32_0, %c0_i32_1 : i32, i32, i32
  }
  func.func @transform_4(%arg0: i32, %arg1: i32) -> (i32, i32, i32) {
    %c0_i32 = arith.constant 0 : i32
    %c0_i32_0 = arith.constant 0 : i32
    %c0_i32_1 = arith.constant 0 : i32
    %c0_i32_2 = arith.constant 0 : i32
    return %c0_i32, %c0_i32_0, %c0_i32_1 : i32, i32, i32
  }
  func.func @transform_5(%arg0: i32, %arg1: i32) -> (i32, i32, i32) {
    %c0_i32 = arith.constant 0 : i32
    %c0_i32_0 = arith.constant 0 : i32
    %c0_i32_1 = arith.constant 0 : i32
    %c0_i32_2 = arith.constant 0 : i32
    return %c0_i32, %c0_i32_0, %c0_i32_1 : i32, i32, i32
  }
  func.func @transform_6(%arg0: i32, %arg1: i32) -> (i32, i32, i32) {
    %c0_i32 = arith.constant 0 : i32
    %c0_i32_0 = arith.constant 0 : i32
    %c0_i32_1 = arith.constant 0 : i32
    %c0_i32_2 = arith.constant 0 : i32
    return %c0_i32, %c0_i32_0, %c0_i32_1 : i32, i32, i32
  }
  func.func @transform_7(%arg0: i32, %arg1: i32) -> (i32, i32) {
    %c0_i32 = arith.constant 0 : i32
    %c0_i32_0 = arith.constant 0 : i32
    %c0_i32_1 = arith.constant 0 : i32
    return %c0_i32, %c0_i32_0 : i32, i32
  }
  func.func @transform_8(%arg0: i32, %arg1: i32) -> (i32, i32) {
    %c0_i32 = arith.constant 0 : i32
    %c0_i32_0 = arith.constant 0 : i32
    %c0_i32_1 = arith.constant 0 : i32
    return %c0_i32, %c0_i32_0 : i32, i32
  }
  func.func @transform_9(%arg0: i32, %arg1: i32) -> (i32, i32) {
    %c0_i32 = arith.constant 0 : i32
    %c0_i32_0 = arith.constant 0 : i32
    %c0_i32_1 = arith.constant 0 : i32
    return %c0_i32, %c0_i32_0 : i32, i32
  }
  func.func @transform_10(%arg0: i32, %arg1: i32) -> (i32, i32) {
    %c0_i32 = arith.constant 0 : i32
    %c0_i32_0 = arith.constant 0 : i32
    %c0_i32_1 = arith.constant 0 : i32
    return %c0_i32, %c0_i32_0 : i32, i32
  }
  func.func @transform_11(%arg0: i32, %arg1: i32) -> (i32, i32, i32) {
    %c0_i32 = arith.constant 0 : i32
    %c0_i32_0 = arith.constant 0 : i32
    return %arg0, %c0_i32, %arg1 : i32, i32, i32
  }
}

</mosaic_0001>

<llo_original>
// kernel: attention_net_forward.1
$region0: #{attention_net_forward.1}
  #allocation0 [shape = 'u32[]', space=smem, size = 0x4, offset = 0x4, fixed_abs, tag = 'smem constant byte address 0x4 - core index']
  #allocation1 [shape = 'u32[72,128]{1,0:T(1,128)}', space=vmem, size = 0x9000, scoped, tag = 'internal scratch']
  %s0 = inlined_call_operand.vmem [shape: f32[2,4,256], index: 0, kind: input, shape index: {}]
  %s1 = inlined_call_operand.vmem [shape: f32[2,4,256], index: 1, kind: input, shape index: {}]
  %s2 = inlined_call_operand.vmem [shape: f32[4,4,1], index: 2, kind: input, shape index: {}]
  %s3 = inlined_call_operand.vmem [shape: f32[4,4,1], index: 3, kind: input, shape index: {}]
  %s4 = inlined_call_operand.vmem [shape: f32[4,4,1], index: 4, kind: input, shape index: {}]
  %s5 = inlined_call_operand.vmem [shape: f32[4,4,1], index: 5, kind: input, shape index: {}]
  %s6 = inlined_call_operand.vmem [shape: f32[4,4,1], index: 6, kind: input, shape index: {}]
  %s7 = inlined_call_operand.vmem [shape: f32[4,1], index: 7, kind: input, shape index: {}]
  %s8 = inlined_call_operand.vmem [shape: f32[4,1], index: 8, kind: input, shape index: {}]
  %s9 = inlined_call_operand.vmem [shape: f32[4,1], index: 9, kind: input, shape index: {}]
  %s10 = inlined_call_operand.vmem [shape: f32[4,1], index: 10, kind: input, shape index: {}]
  %s11 = inlined_call_operand.vmem [shape: f32[2,4,256], index: 11, kind: output, shape index: {}]
  %s12 = sld [smem:[#allocation0]]
  $region54: #{attention_net_forward.1} parent=0
    _
  %s14 = ssub.s32 1, %s12
  %s15 = scalar_select 0, %s14, %s12
  // Predicated region
  $region2: #{attention_net_forward.1} parent=0 // pred_check
    _
  $region3: #{attention_net_forward.1} parent=0 // pred_check_branch
    %17 = sbr.rel (0) target = $region5
  $region4: #{attention_net_forward.1} parent=0 // pred_region
    _
  $region5: #{attention_net_forward.1} parent=0 // pred_fallthru
    _
  // Predicated region
  $region6: #{attention_net_forward.1} parent=0 // pred_check
    _
  $region7: #{attention_net_forward.1} parent=0 // pred_check_branch
    %19 = sbr.rel (0) target = $region9
  $region8: #{attention_net_forward.1} parent=0 // pred_region
    _
  $region9: #{attention_net_forward.1} parent=0 // pred_fallthru
    _
  // Predicated region
  $region10: #{attention_net_forward.1} parent=0 // pred_check
    _
  $region11: #{attention_net_forward.1} parent=0 // pred_check_branch
    %21 = sbr.rel (0) target = $region13
  $region12: #{attention_net_forward.1} parent=0 // pred_region
    _
  $region13: #{attention_net_forward.1} parent=0 // pred_fallthru
    _
  // Predicated region
  $region14: #{attention_net_forward.1} parent=0 // pred_check
    _
  $region15: #{attention_net_forward.1} parent=0 // pred_check_branch
    %23 = sbr.rel (0) target = $region17
  $region16: #{attention_net_forward.1} parent=0 // pred_region
    _
  $region17: #{attention_net_forward.1} parent=0 // pred_fallthru
    _
  // Predicated region
  $region18: #{attention_net_forward.1} parent=0 // pred_check
    _
  $region19: #{attention_net_forward.1} parent=0 // pred_check_branch
    %25 = sbr.rel (0) target = $region21
  $region20: #{attention_net_forward.1} parent=0 // pred_region
    _
  $region21: #{attention_net_forward.1} parent=0 // pred_fallthru
    _
  // Predicated region
  $region22: #{attention_net_forward.1} parent=0 // pred_check
    _
  $region23: #{attention_net_forward.1} parent=0 // pred_check_branch
    %27 = sbr.rel (0) target = $region25
  $region24: #{attention_net_forward.1} parent=0 // pred_region
    _
  $region25: #{attention_net_forward.1} parent=0 // pred_fallthru
    _
  // Predicated region
  $region26: #{attention_net_forward.1} parent=0 // pred_check
    _
  $region27: #{attention_net_forward.1} parent=0 // pred_check_branch
    %29 = sbr.rel (0) target = $region29
  $region28: #{attention_net_forward.1} parent=0 // pred_region
    _
  $region29: #{attention_net_forward.1} parent=0 // pred_fallthru
    _
  // Predicated region
  $region30: #{attention_net_forward.1} parent=0 // pred_check
    _
  $region31: #{attention_net_forward.1} parent=0 // pred_check_branch
    %31 = sbr.rel (0) target = $region33
  $region32: #{attention_net_forward.1} parent=0 // pred_region
    _
  $region33: #{attention_net_forward.1} parent=0 // pred_fallthru
    _
  // Predicated region
  $region34: #{attention_net_forward.1} parent=0 // pred_check
    _
  $region35: #{attention_net_forward.1} parent=0 // pred_check_branch
    %33 = sbr.rel (0) target = $region37
  $region36: #{attention_net_forward.1} parent=0 // pred_region
    _
  $region37: #{attention_net_forward.1} parent=0 // pred_fallthru
    _
  // Predicated region
  $region38: #{attention_net_forward.1} parent=0 // pred_check
    _
  $region39: #{attention_net_forward.1} parent=0 // pred_check_branch
    %35 = sbr.rel (0) target = $region41
  $region40: #{attention_net_forward.1} parent=0 // pred_region
    _
  $region41: #{attention_net_forward.1} parent=0 // pred_fallthru
    _
  // Predicated region
  $region42: #{attention_net_forward.1} parent=0 // pred_check
    _
  $region43: #{attention_net_forward.1} parent=0 // pred_check_branch
    %37 = sbr.rel (0) target = $region45
  $region44: #{attention_net_forward.1} parent=0 // pred_region
    _
  $region45: #{attention_net_forward.1} parent=0 // pred_fallthru
    _
  %v38 = vld [vmem:[%s0] sm:$0xff]
  %v39 = vld [vmem:[%s0 + $0x8] sm:$0xff]
  %v40 = vld [vmem:[%s2] sm:$0xf]
  %42 = vset.pattern.permute.xlu0 0
  %43 = vperm.xlu0 %42, %v40
  %v44 = vpop.permute.xlu0 %43
  %v48 = vperm.slane %v38, 0
  %v49 = vperm.slane %v38, 4
  %v50 = vperm.slane %v39, 0
  %v51 = vperm.slane %v39, 4
  %v56 = vperm.slane %v48, 0
  %v57 = vperm.slane %v49, 0
  %v58 = vperm.slane %v50, 0
  %v59 = vperm.slane %v51, 0
  %v60 = vmul.f32 %v44, %v56
  %v61 = vmul.f32 %v44, %v57
  %v62 = vmul.f32 %v44, %v58
  %v63 = vmul.f32 %v44, %v59
  %s64 = scalar_lea.vmem %s2, 4
  %v65 = vld [vmem:[%s64] sm:$0xf]
  %67 = vset.pattern.permute.xlu0 0
  %68 = vperm.xlu0 %67, %v65
  %v69 = vpop.permute.xlu0 %68
  %v71 = vperm.slane %v38, 1
  %v72 = vperm.slane %v38, 5
  %v73 = vperm.slane %v39, 1
  %v74 = vperm.slane %v39, 5
  %v79 = vperm.slane %v71, 1
  %v80 = vperm.slane %v72, 1
  %v81 = vperm.slane %v73, 1
  %v82 = vperm.slane %v74, 1
  %v83 = vmul.f32 %v69, %v79
  %v84 = vmul.f32 %v69, %v80
  %v85 = vmul.f32 %v69, %v81
  %v86 = vmul.f32 %v69, %v82
  %v87 = vadd.f32 %v60, %v83
  %v88 = vadd.f32 %v61, %v84
  %v89 = vadd.f32 %v62, %v85
  %v90 = vadd.f32 %v63, %v86
  %s91 = scalar_lea.vmem %s2, 8
  %v92 = vld [vmem:[%s91] sm:$0xf]
  %94 = vset.pattern.permute.xlu0 0
  %95 = vperm.xlu0 %94, %v92
  %v96 = vpop.permute.xlu0 %95
  %v98 = vperm.slane %v38, 2
  %v99 = vperm.slane %v38, 6
  %v100 = vperm.slane %v39, 2
  %v101 = vperm.slane %v39, 6
  %v106 = vperm.slane %v98, 2
  %v107 = vperm.slane %v99, 2
  %v108 = vperm.slane %v100, 2
  %v109 = vperm.slane %v101, 2
  %v110 = vmul.f32 %v96, %v106
  %v111 = vmul.f32 %v96, %v107
  %v112 = vmul.f32 %v96, %v108
  %v113 = vmul.f32 %v96, %v109
  %v114 = vadd.f32 %v87, %v110
  %v115 = vadd.f32 %v88, %v111
  %v116 = vadd.f32 %v89, %v112
  %v117 = vadd.f32 %v90, %v113
  %s118 = scalar_lea.vmem %s2, 12
  %v119 = vld [vmem:[%s118] sm:$0xf]
  %121 = vset.pattern.permute.xlu0 0
  %122 = vperm.xlu0 %121, %v119
  %v123 = vpop.permute.xlu0 %122
  %v125 = vperm.slane %v38, 3
  %v126 = vperm.slane %v38, 7
  %v127 = vperm.slane %v39, 3
  %v128 = vperm.slane %v39, 7
  %v133 = vperm.slane %v125, 3
  %v134 = vperm.slane %v126, 3
  %v135 = vperm.slane %v127, 3
  %v136 = vperm.slane %v128, 3
  %v137 = vmul.f32 %v123, %v133
  %v138 = vmul.f32 %v123, %v134
  %v139 = vmul.f32 %v123, %v135
  %v140 = vmul.f32 %v123, %v136
  %v141 = vadd.f32 %v114, %v137
  %v142 = vadd.f32 %v115, %v138
  %v143 = vadd.f32 %v116, %v139
  %v144 = vadd.f32 %v117, %v140
  %v145 = vld [vmem:[%s1] sm:$0xff]
  %v146 = vld [vmem:[%s1 + $0x8] sm:$0xff]
  %v147 = vld [vmem:[%s3] sm:$0xf]
  %149 = vset.pattern.permute.xlu0 0
  %150 = vperm.xlu0 %149, %v147
  %v151 = vpop.permute.xlu0 %150
  %v155 = vperm.slane %v145, 0
  %v156 = vperm.slane %v145, 4
  %v157 = vperm.slane %v146, 0
  %v158 = vperm.slane %v146, 4
  %v163 = vperm.slane %v155, 0
  %v164 = vperm.slane %v156, 0
  %v165 = vperm.slane %v157, 0
  %v166 = vperm.slane %v158, 0
  %v167 = vmul.f32 %v151, %v163
  %v168 = vmul.f32 %v151, %v164
  %v169 = vmul.f32 %v151, %v165
  %v170 = vmul.f32 %v151, %v166
  %s171 = scalar_lea.vmem %s3, 4
  %v172 = vld [vmem:[%s171] sm:$0xf]
  %174 = vset.pattern.permute.xlu0 0
  %175 = vperm.xlu0 %174, %v172
  %v176 = vpop.permute.xlu0 %175
  %v178 = vperm.slane %v145, 1
  %v179 = vperm.slane %v145, 5
  %v180 = vperm.slane %v146, 1
  %v181 = vperm.slane %v146, 5
  %v186 = vperm.slane %v178, 1
  %v187 = vperm.slane %v179, 1
  %v188 = vperm.slane %v180, 1
  %v189 = vperm.slane %v181, 1
  %v190 = vmul.f32 %v176, %v186
  %v191 = vmul.f32 %v176, %v187
  %v192 = vmul.f32 %v176, %v188
  %v193 = vmul.f32 %v176, %v189
  %v194 = vadd.f32 %v167, %v190
  %v195 = vadd.f32 %v168, %v191
  %v196 = vadd.f32 %v169, %v192
  %v197 = vadd.f32 %v170, %v193
  %s198 = scalar_lea.vmem %s3, 8
  %v199 = vld [vmem:[%s198] sm:$0xf]
  %201 = vset.pattern.permute.xlu0 0
  %202 = vperm.xlu0 %201, %v199
  %v203 = vpop.permute.xlu0 %202
  %v205 = vperm.slane %v145, 2
  %v206 = vperm.slane %v145, 6
  %v207 = vperm.slane %v146, 2
  %v208 = vperm.slane %v146, 6
  %v213 = vperm.slane %v205, 2
  %v214 = vperm.slane %v206, 2
  %v215 = vperm.slane %v207, 2
  %v216 = vperm.slane %v208, 2
  %v217 = vmul.f32 %v203, %v213
  %v218 = vmul.f32 %v203, %v214
  %v219 = vmul.f32 %v203, %v215
  %v220 = vmul.f32 %v203, %v216
  %v221 = vadd.f32 %v194, %v217
  %v222 = vadd.f32 %v195, %v218
  %v223 = vadd.f32 %v196, %v219
  %v224 = vadd.f32 %v197, %v220
  %s225 = scalar_lea.vmem %s3, 12
  %v226 = vld [vmem:[%s225] sm:$0xf]
  %228 = vset.pattern.permute.xlu0 0
  %229 = vperm.xlu0 %228, %v226
  %v230 = vpop.permute.xlu0 %229
  %v232 = vperm.slane %v145, 3
  %v233 = vperm.slane %v145, 7
  %v234 = vperm.slane %v146, 3
  %v235 = vperm.slane %v146, 7
  %v240 = vperm.slane %v232, 3
  %v241 = vperm.slane %v233, 3
  %v242 = vperm.slane %v234, 3
  %v243 = vperm.slane %v235, 3
  %v244 = vmul.f32 %v230, %v240
  %v245 = vmul.f32 %v230, %v241
  %v246 = vmul.f32 %v230, %v242
  %v247 = vmul.f32 %v230, %v243
  %v248 = vadd.f32 %v221, %v244
  %v249 = vadd.f32 %v222, %v245
  %v250 = vadd.f32 %v223, %v246
  %v251 = vadd.f32 %v224, %v247
  %v252 = vadd.f32 %v141, %v248
  %v253 = vadd.f32 %v142, %v249
  %v254 = vadd.f32 %v143, %v250
  %v255 = vadd.f32 %v144, %v251
  %v256 = vld [vmem:[%s7] sm:$0xf]
  %258 = vset.pattern.permute.xlu0 0
  %259 = vperm.xlu0 %258, %v256
  %v260 = vpop.permute.xlu0 %259
  %v262 = vadd.f32 %v252, %v260
  %v263 = vadd.f32 %v253, %v260
  %v264 = vadd.f32 %v254, %v260
  %v265 = vadd.f32 %v255, %v260
  %v266 = vmax.f32 %v262, 0.0
  %v267 = vmax.f32 %v263, 0.0
  %v268 = vmax.f32 %v264, 0.0
  %v269 = vmax.f32 %v265, 0.0
  %v270 = vld [vmem:[%s4] sm:$0xf]
  %272 = vset.pattern.permute.xlu0 0
  %273 = vperm.xlu0 %272, %v270
  %v274 = vpop.permute.xlu0 %273
  %v276 = vperm.slane %v266, 0
  %v277 = vperm.slane %v267, 0
  %v278 = vperm.slane %v268, 0
  %v279 = vperm.slane %v269, 0
  %v280 = vmul.f32 %v274, %v276
  %v281 = vmul.f32 %v274, %v277
  %v282 = vmul.f32 %v274, %v278
  %v283 = vmul.f32 %v274, %v279
  %s284 = scalar_lea.vmem %s4, 4
  %v285 = vld [vmem:[%s284] sm:$0xf]
  %287 = vset.pattern.permute.xlu0 0
  %288 = vperm.xlu0 %287, %v285
  %v289 = vpop.permute.xlu0 %288
  %v291 = vperm.slane %v266, 1
  %v292 = vperm.slane %v267, 1
  %v293 = vperm.slane %v268, 1
  %v294 = vperm.slane %v269, 1
  %v295 = vmul.f32 %v289, %v291
  %v296 = vmul.f32 %v289, %v292
  %v297 = vmul.f32 %v289, %v293
  %v298 = vmul.f32 %v289, %v294
  %v299 = vadd.f32 %v280, %v295
  %v300 = vadd.f32 %v281, %v296
  %v301 = vadd.f32 %v282, %v297
  %v302 = vadd.f32 %v283, %v298
  %s303 = scalar_lea.vmem %s4, 8
  %v304 = vld [vmem:[%s303] sm:$0xf]
  %306 = vset.pattern.permute.xlu0 0
  %307 = vperm.xlu0 %306, %v304
  %v308 = vpop.permute.xlu0 %307
  %v310 = vperm.slane %v266, 2
  %v311 = vperm.slane %v267, 2
  %v312 = vperm.slane %v268, 2
  %v313 = vperm.slane %v269, 2
  %v314 = vmul.f32 %v308, %v310
  %v315 = vmul.f32 %v308, %v311
  %v316 = vmul.f32 %v308, %v312
  %v317 = vmul.f32 %v308, %v313
  %v318 = vadd.f32 %v299, %v314
  %v319 = vadd.f32 %v300, %v315
  %v320 = vadd.f32 %v301, %v316
  %v321 = vadd.f32 %v302, %v317
  %s322 = scalar_lea.vmem %s4, 12
  %v323 = vld [vmem:[%s322] sm:$0xf]
  %325 = vset.pattern.permute.xlu0 0
  %326 = vperm.xlu0 %325, %v323
  %v327 = vpop.permute.xlu0 %326
  %v329 = vperm.slane %v266, 3
  %v330 = vperm.slane %v267, 3
  %v331 = vperm.slane %v268, 3
  %v332 = vperm.slane %v269, 3
  %v333 = vmul.f32 %v327, %v329
  %v334 = vmul.f32 %v327, %v330
  %v335 = vmul.f32 %v327, %v331
  %v336 = vmul.f32 %v327, %v332
  %v337 = vadd.f32 %v318, %v333
  %v338 = vadd.f32 %v319, %v334
  %v339 = vadd.f32 %v320, %v335
  %v340 = vadd.f32 %v321, %v336
  %v341 = vld [vmem:[%s8] sm:$0xf]
  %343 = vset.pattern.permute.xlu0 0
  %344 = vperm.xlu0 %343, %v341
  %v345 = vpop.permute.xlu0 %344
  %v347 = vadd.f32 %v337, %v345
  %v348 = vadd.f32 %v338, %v345
  %v349 = vadd.f32 %v339, %v345
  %v350 = vadd.f32 %v340, %v345
  %v351 = vxor.u32 %v347, 2147483648
  %v352 = vxor.u32 %v348, 2147483648
  %v353 = vxor.u32 %v349, 2147483648
  %v354 = vxor.u32 %v350, 2147483648
  %v355 = vmul.f32 %v351, 1.442695
  %v356 = vpow.pop %v355
  %v357 = vmul.f32 %v352, 1.442695
  %v358 = vpow.pop %v357
  %v359 = vmul.f32 %v353, 1.442695
  %v360 = vpow.pop %v359
  %v361 = vmul.f32 %v354, 1.442695
  %v362 = vpow.pop %v361
  %v363 = vadd.f32 %v356, 1.0
  %v364 = vadd.f32 %v358, 1.0
  %v365 = vadd.f32 %v360, 1.0
  %v366 = vadd.f32 %v362, 1.0
  %v367 = vrcp.pop %v363
  %v368 = vmul.f32 %v363, %v367
  %v369 = vsub.f32 1.0, %v368
  %v370 = vmul.f32 %v367, %v369
  %v371 = vadd.f32 %v367, %v370
  %vm372 = vweird.f32 %v363
  %vm373 = vweird.f32 %v367
  %vm374 = vmor %vm372, %vm373
  %v375 = vsel %vm374, %v367, %v371
  %v376 = vand.u32 2147483647, %v363
  %vm377 = vcmp.eq.f32.partialorder %v376, 8.507059e+37
  %v378 = vand.u32 %v363, 2147483648
  %v379 = vor.u32 1.1754944e-38, %v378
  %v380 = vsel %vm377, %v379, %v375
  %v381 = vmul.f32 1.0, %v380
  %v382 = vrcp.pop %v364
  %v383 = vmul.f32 %v364, %v382
  %v384 = vsub.f32 1.0, %v383
  %v385 = vmul.f32 %v382, %v384
  %v386 = vadd.f32 %v382, %v385
  %vm387 = vweird.f32 %v364
  %vm388 = vweird.f32 %v382
  %vm389 = vmor %vm387, %vm388
  %v390 = vsel %vm389, %v382, %v386
  %v391 = vand.u32 2147483647, %v364
  %vm392 = vcmp.eq.f32.partialorder %v391, 8.507059e+37
  %v393 = vand.u32 %v364, 2147483648
  %v394 = vor.u32 1.1754944e-38, %v393
  %v395 = vsel %vm392, %v394, %v390
  %v396 = vmul.f32 1.0, %v395
  %v397 = vrcp.pop %v365
  %v398 = vmul.f32 %v365, %v397
  %v399 = vsub.f32 1.0, %v398
  %v400 = vmul.f32 %v397, %v399
  %v401 = vadd.f32 %v397, %v400
  %vm402 = vweird.f32 %v365
  %vm403 = vweird.f32 %v397
  %vm404 = vmor %vm402, %vm403
  %v405 = vsel %vm404, %v397, %v401
  %v406 = vand.u32 2147483647, %v365
  %vm407 = vcmp.eq.f32.partialorder %v406, 8.507059e+37
  %v408 = vand.u32 %v365, 2147483648
  %v409 = vor.u32 1.1754944e-38, %v408
  %v410 = vsel %vm407, %v409, %v405
  %v411 = vmul.f32 1.0, %v410
  %v412 = vrcp.pop %v366
  %v413 = vmul.f32 %v366, %v412
  %v414 = vsub.f32 1.0, %v413
  %v415 = vmul.f32 %v412, %v414
  %v416 = vadd.f32 %v412, %v415
  %vm417 = vweird.f32 %v366
  %vm418 = vweird.f32 %v412
  %vm419 = vmor %vm417, %vm418
  %v420 = vsel %vm419, %v412, %v416
  %v421 = vand.u32 2147483647, %v366
  %vm422 = vcmp.eq.f32.partialorder %v421, 8.507059e+37
  %v423 = vand.u32 %v366, 2147483648
  %v424 = vor.u32 1.1754944e-38, %v423
  %v425 = vsel %vm422, %v424, %v420
  %v426 = vmul.f32 1.0, %v425
  %v427 = vld [vmem:[%s5] sm:$0xf]
  %429 = vset.pattern.permute.xlu0 0
  %430 = vperm.xlu0 %429, %v427
  %v431 = vpop.permute.xlu0 %430
  %v433 = vperm.slane %v381, 0
  %v434 = vperm.slane %v396, 0
  %v435 = vperm.slane %v411, 0
  %v436 = vperm.slane %v426, 0
  %v437 = vmul.f32 %v431, %v433
  %v438 = vmul.f32 %v431, %v434
  %v439 = vmul.f32 %v431, %v435
  %v440 = vmul.f32 %v431, %v436
  %s441 = scalar_lea.vmem %s5, 4
  %v442 = vld [vmem:[%s441] sm:$0xf]
  %444 = vset.pattern.permute.xlu0 0
  %445 = vperm.xlu0 %444, %v442
  %v446 = vpop.permute.xlu0 %445
  %v448 = vperm.slane %v381, 1
  %v449 = vperm.slane %v396, 1
  %v450 = vperm.slane %v411, 1
  %v451 = vperm.slane %v426, 1
  %v452 = vmul.f32 %v446, %v448
  %v453 = vmul.f32 %v446, %v449
  %v454 = vmul.f32 %v446, %v450
  %v455 = vmul.f32 %v446, %v451
  %v456 = vadd.f32 %v437, %v452
  %v457 = vadd.f32 %v438, %v453
  %v458 = vadd.f32 %v439, %v454
  %v459 = vadd.f32 %v440, %v455
  %s460 = scalar_lea.vmem %s5, 8
  %v461 = vld [vmem:[%s460] sm:$0xf]
  %463 = vset.pattern.permute.xlu0 0
  %464 = vperm.xlu0 %463, %v461
  %v465 = vpop.permute.xlu0 %464
  %v467 = vperm.slane %v381, 2
  %v468 = vperm.slane %v396, 2
  %v469 = vperm.slane %v411, 2
  %v470 = vperm.slane %v426, 2
  %v471 = vmul.f32 %v465, %v467
  %v472 = vmul.f32 %v465, %v468
  %v473 = vmul.f32 %v465, %v469
  %v474 = vmul.f32 %v465, %v470
  %v475 = vadd.f32 %v456, %v471
  %v476 = vadd.f32 %v457, %v472
  %v477 = vadd.f32 %v458, %v473
  %v478 = vadd.f32 %v459, %v474
  %s479 = scalar_lea.vmem %s5, 12
  %v480 = vld [vmem:[%s479] sm:$0xf]
  %482 = vset.pattern.permute.xlu0 0
  %483 = vperm.xlu0 %482, %v480
  %v484 = vpop.permute.xlu0 %483
  %v486 = vperm.slane %v381, 3
  %v487 = vperm.slane %v396, 3
  %v488 = vperm.slane %v411, 3
  %v489 = vperm.slane %v426, 3
  %v490 = vmul.f32 %v484, %v486
  %v491 = vmul.f32 %v484, %v487
  %v492 = vmul.f32 %v484, %v488
  %v493 = vmul.f32 %v484, %v489
  %v494 = vadd.f32 %v475, %v490
  %v495 = vadd.f32 %v476, %v491
  %v496 = vadd.f32 %v477, %v492
  %v497 = vadd.f32 %v478, %v493
  %v498 = vld [vmem:[%s9] sm:$0xf]
  %500 = vset.pattern.permute.xlu0 0
  %501 = vperm.xlu0 %500, %v498
  %v502 = vpop.permute.xlu0 %501
  %v504 = vadd.f32 %v494, %v502
  %v505 = vadd.f32 %v495, %v502
  %v506 = vadd.f32 %v496, %v502
  %v507 = vadd.f32 %v497, %v502
  %508 = vst [vmem:[#allocation1] ss:$2 sm:$0xff] %v38
  %v509 = vld.sshfl [vmem:[#allocation1] sm:$0xff pattern:$0x75316420]
  %v510 = vld.sshfl [vmem:[#allocation1 + $0x8] sm:$0xff pattern:$0x75316420]
  %s511 = scalar_lea.vmem [#allocation1], 16
  %512 = vst [vmem:[%s511] ss:$2 sm:$0xff] %v39
  %v513 = vld.sshfl [vmem:[#allocation1 + $0x10] sm:$0xff pattern:$0x75316420]
  %v514 = vld.sshfl [vmem:[#allocation1 + $0x18] sm:$0xff pattern:$0x75316420]
  %v519 = vmul.f32 %v504, %v509
  %v520 = vmul.f32 %v505, %v510
  %v521 = vmul.f32 %v506, %v513
  %v522 = vmul.f32 %v507, %v514
  %v523 = vld [vmem:[%s6] sm:$0xf]
  %525 = vset.pattern.permute.xlu0 0
  %526 = vperm.xlu0 %525, %v523
  %v527 = vpop.permute.xlu0 %526
  %v529 = vperm.slane %v519, 0
  %v530 = vperm.slane %v520, 0
  %v531 = vperm.slane %v521, 0
  %v532 = vperm.slane %v522, 0
  %v533 = vmul.f32 %v527, %v529
  %v534 = vmul.f32 %v527, %v530
  %v535 = vmul.f32 %v527, %v531
  %v536 = vmul.f32 %v527, %v532
  %s537 = scalar_lea.vmem %s6, 4
  %v538 = vld [vmem:[%s537] sm:$0xf]
  %540 = vset.pattern.permute.xlu0 0
  %541 = vperm.xlu0 %540, %v538
  %v542 = vpop.permute.xlu0 %541
  %v544 = vperm.slane %v519, 1
  %v545 = vperm.slane %v520, 1
  %v546 = vperm.slane %v521, 1
  %v547 = vperm.slane %v522, 1
  %v548 = vmul.f32 %v542, %v544
  %v549 = vmul.f32 %v542, %v545
  %v550 = vmul.f32 %v542, %v546
  %v551 = vmul.f32 %v542, %v547
  %v552 = vadd.f32 %v533, %v548
  %v553 = vadd.f32 %v534, %v549
  %v554 = vadd.f32 %v535, %v550
  %v555 = vadd.f32 %v536, %v551
  %s556 = scalar_lea.vmem %s6, 8
  %v557 = vld [vmem:[%s556] sm:$0xf]
  %559 = vset.pattern.permute.xlu0 0
  %560 = vperm.xlu0 %559, %v557
  %v561 = vpop.permute.xlu0 %560
  %v563 = vperm.slane %v519, 2
  %v564 = vperm.slane %v520, 2
  %v565 = vperm.slane %v521, 2
  %v566 = vperm.slane %v522, 2
  %v567 = vmul.f32 %v561, %v563
  %v568 = vmul.f32 %v561, %v564
  %v569 = vmul.f32 %v561, %v565
  %v570 = vmul.f32 %v561, %v566
  %v571 = vadd.f32 %v552, %v567
  %v572 = vadd.f32 %v553, %v568
  %v573 = vadd.f32 %v554, %v569
  %v574 = vadd.f32 %v555, %v570
  %s575 = scalar_lea.vmem %s6, 12
  %v576 = vld [vmem:[%s575] sm:$0xf]
  %578 = vset.pattern.permute.xlu0 0
  %579 = vperm.xlu0 %578, %v576
  %v580 = vpop.permute.xlu0 %579
  %v582 = vperm.slane %v519, 3
  %v583 = vperm.slane %v520, 3
  %v584 = vperm.slane %v521, 3
  %v585 = vperm.slane %v522, 3
  %v586 = vmul.f32 %v580, %v582
  %v587 = vmul.f32 %v580, %v583
  %v588 = vmul.f32 %v580, %v584
  %v589 = vmul.f32 %v580, %v585
  %v590 = vadd.f32 %v571, %v586
  %v591 = vadd.f32 %v572, %v587
  %v592 = vadd.f32 %v573, %v588
  %v593 = vadd.f32 %v574, %v589
  %v594 = vld [vmem:[%s10] sm:$0xf]
  %596 = vset.pattern.permute.xlu0 0
  %597 = vperm.xlu0 %596, %v594
  %v598 = vpop.permute.xlu0 %597
  %v600 = vadd.f32 %v590, %v598
  %v601 = vadd.f32 %v591, %v598
  %v602 = vadd.f32 %v592, %v598
  %v603 = vadd.f32 %v593, %v598
  %v604 = vmax.f32 %v600, 0.0
  %v605 = vmax.f32 %v601, 0.0
  %v606 = vmax.f32 %v602, 0.0
  %v607 = vmax.f32 %v603, 0.0
  %v612 = vrot.slane %v605, 4
  %v613 = vrot.slane %v607, 4
  %vm614 = vcmask 1043456
  %v615 = vsel %vm614, %v604, %v612
  %v616 = vsel %vm614, %v606, %v613
  %619 = vst [vmem:[%s11] sm:$0xff] %v615
  %620 = vst [vmem:[%s11 + $0x8] sm:$0xff] %v616
  // Predicated region
  $region46: #{attention_net_forward.1} parent=0 // pred_check
    _
  $region47: #{attention_net_forward.1} parent=0 // pred_check_branch
    %622 = sbr.rel (0) target = $region49
  $region48: #{attention_net_forward.1} parent=0 // pred_region
    _
  $region49: #{attention_net_forward.1} parent=0 // pred_fallthru
    _
  // Predicated region
  $region50: #{attention_net_forward.1} parent=0 // pred_check
    _
  $region51: #{attention_net_forward.1} parent=0 // pred_check_branch
    %624 = sbr.rel (0) target = $region53
  $region52: #{attention_net_forward.1} parent=0 // pred_region
    _
  $region53: #{attention_net_forward.1} parent=0 // pred_fallthru
    _

</llo_original>
